<compile_context>
chip_gen: v6e
topology: v6e:2x2x1
jax: 0.10.0
libtpu: 0.0.40
codegen_flags: <defaults>
</compile_context>

<pallas_src>
import jax
import jax.numpy as jnp
from jax.experimental import pallas as pl
from jax.experimental.pallas import tpu as pltpu

HIDDEN = 14      # hidden_linear: Linear(1, 14)
LANES = 128      # TPU lane width


def mlp_kernel(x_ref, w1_ref, b1_ref, w2_ref, b2_ref, o_ref):
    """x_ref/o_ref: (tm, 128) VMEM tiles (batch packed dense on sublanes+lanes).
    w1/b1/w2: (14,) f32 in SMEM, b2: (1,) f32 in SMEM."""
    x = x_ref[...]                                    # (tm, 128) f32
    # Seed the accumulator with the output bias (folds the final +b2 into iter 0).
    acc = jnp.full_like(x, b2_ref[0])
    # Static unroll over the 14 hidden units: VPU mul/add + EUP tanh, scalar
    # weights splat from SMEM.  No MXU, no cross-lane traffic, no masked stores.
    for j in range(HIDDEN):
        h = jnp.tanh(x * w1_ref[j] + b1_ref[j])       # Linear(1,14)[j] + tanh
        acc = acc + h * w2_ref[j]                     # Linear(14,1) contribution
    o_ref[...] = acc


def _round_up(a, b):
    return (a + b - 1) // b * b


def subclass_functional_model(x, w1, b1, w2, b2, *, block_rows=512):
    """x: [N, 1] float32 -> [N, 1] float32.

    The batch is flattened, zero-padded and reshaped to a lane-dense [rows, 128]
    slab; the kernel is tiled over rows with a "parallel" grid axis.
    """
    n = x.shape[0]
    rows = _round_up(max(pl.cdiv(n, LANES), 1), 8)    # >= 8 sublanes per tile
    tm = min(block_rows, rows)                        # tile rows (multiple of 8)
    rows = _round_up(rows, tm)
    total = rows * LANES

    flat = jnp.pad(x.reshape(-1).astype(jnp.float32), (0, total - n))
    x2d = flat.reshape(rows, LANES)

    out2d = pl.pallas_call(
        mlp_kernel,
        out_shape=jax.ShapeDtypeStruct((rows, LANES), jnp.float32),
        grid=(rows // tm,),
        in_specs=[
            pl.BlockSpec((tm, LANES), lambda i: (i, 0)),            # x tile (VMEM)
            pl.BlockSpec(memory_space=pltpu.MemorySpace.SMEM),      # w1 (14,)
            pl.BlockSpec(memory_space=pltpu.MemorySpace.SMEM),      # b1 (14,)
            pl.BlockSpec(memory_space=pltpu.MemorySpace.SMEM),      # w2 (14,)
            pl.BlockSpec(memory_space=pltpu.MemorySpace.SMEM),      # b2 (1,)
        ],
        out_specs=pl.BlockSpec((tm, LANES), lambda i: (i, 0)),
        compiler_params=pltpu.CompilerParams(
            dimension_semantics=("parallel",)),
    )(x2d, w1, b1, w2, b2)

    return out2d.reshape(total)[:n].reshape(n, 1)


def init_params(key):
    """Deterministic init mimicking nn.Linear's default U(-1/sqrt(fan_in), +1/sqrt(fan_in)).

    Returned as flat f32 vectors: w1,b1,w2 of shape (14,), b2 of shape (1,)."""
    k1, k2, k3, k4 = jax.random.split(key, 4)
    bound1 = 1.0 / jnp.sqrt(1.0)
    w1 = jax.random.uniform(k1, (HIDDEN,), jnp.float32, -bound1, bound1)  # hidden weight
    b1 = jax.random.uniform(k2, (HIDDEN,), jnp.float32, -bound1, bound1)  # hidden bias
    bound2 = 1.0 / jnp.sqrt(float(HIDDEN))
    w2 = jax.random.uniform(k3, (HIDDEN,), jnp.float32, -bound2, bound2)  # output weight
    b2 = jax.random.uniform(k4, (1,), jnp.float32, -bound2, bound2)       # output bias
    return w1, b1, w2, b2


if __name__ == "__main__":
    key = jax.random.PRNGKey(0)
    kx, kp = jax.random.split(key)

    # Small batch of scalar inputs, as the module's Linear(1, 14) implies: x is [N, 1].
    N = 8
    x = jax.random.normal(kx, (N, 1), jnp.float32)

    w1, b1, w2, b2 = init_params(kp)

    out = subclass_functional_model(x, w1, b1, w2, b2)
    out = jax.block_until_ready(out)

    # Reference in plain JAX (same math as the PyTorch forward):
    # tanh(x @ W1^T + b1) @ W2^T + b2
    ref = jnp.tanh(x @ w1.reshape(1, HIDDEN) + b1.reshape(1, HIDDEN)) \
          @ w2.reshape(HIDDEN, 1) + b2.reshape(1, 1)

    assert out.shape == (N, 1)
    assert jnp.allclose(out, ref, atol=1e-5, rtol=1e-5)

    print("KERNEL_OK")
</pallas_src>

<mosaic_0001>
module attributes {stable_mosaic.version = 11 : i64} {
  func.func @mlp_kernel(%arg0: i32, %arg1: memref<8x128xf32, #tpu.memory_space<vmem>>, %arg2: memref<14xf32, #tpu.memory_space<smem>>, %arg3: memref<14xf32, #tpu.memory_space<smem>>, %arg4: memref<14xf32, #tpu.memory_space<smem>>, %arg5: memref<1xf32, #tpu.memory_space<smem>>, %arg6: memref<8x128xf32, #tpu.memory_space<vmem>>) attributes {dimension_semantics = [#tpu.dimension_semantics<parallel>], iteration_bounds = array<i64: 1>, scalar_prefetch = 0 : i64, scratch_operands = 0 : i64, tpu.core_type = #tpu.core_type<tc>, window_params = [{transform_indices = @transform_0, window_bounds = array<i64: 8, 128>}, {transform_indices = @transform_1, window_bounds = array<i64: 14>}, {transform_indices = @transform_2, window_bounds = array<i64: 14>}, {transform_indices = @transform_3, window_bounds = array<i64: 14>}, {transform_indices = @transform_4, window_bounds = array<i64: 1>}, {transform_indices = @transform_5, window_bounds = array<i64: 8, 128>}]} {
    %c0 = arith.constant 0 : index
    %c0_0 = arith.constant 0 : index
    %0 = vector.load %arg1[%c0, %c0_0] : memref<8x128xf32, #tpu.memory_space<vmem>>, vector<8x128xf32>
    %c0_1 = arith.constant 0 : index
    %1 = memref.load %arg5[%c0_1] : memref<1xf32, #tpu.memory_space<smem>>
    %2 = vector.broadcast %1 : f32 to vector<8x128xf32>
    %c0_2 = arith.constant 0 : index
    %3 = memref.load %arg2[%c0_2] : memref<14xf32, #tpu.memory_space<smem>>
    %4 = vector.broadcast %3 : f32 to vector<8x128xf32>
    %5 = arith.mulf %0, %4 : vector<8x128xf32>
    %c0_3 = arith.constant 0 : index
    %6 = memref.load %arg3[%c0_3] : memref<14xf32, #tpu.memory_space<smem>>
    %7 = vector.broadcast %6 : f32 to vector<8x128xf32>
    %8 = arith.addf %5, %7 : vector<8x128xf32>
    %9 = math.tanh %8 : vector<8x128xf32>
    %c0_4 = arith.constant 0 : index
    %10 = memref.load %arg4[%c0_4] : memref<14xf32, #tpu.memory_space<smem>>
    %11 = vector.broadcast %10 : f32 to vector<8x128xf32>
    %12 = arith.mulf %9, %11 : vector<8x128xf32>
    %13 = arith.addf %2, %12 : vector<8x128xf32>
    %c1 = arith.constant 1 : index
    %14 = memref.load %arg2[%c1] : memref<14xf32, #tpu.memory_space<smem>>
    %15 = vector.broadcast %14 : f32 to vector<8x128xf32>
    %16 = arith.mulf %0, %15 : vector<8x128xf32>
    %c1_5 = arith.constant 1 : index
    %17 = memref.load %arg3[%c1_5] : memref<14xf32, #tpu.memory_space<smem>>
    %18 = vector.broadcast %17 : f32 to vector<8x128xf32>
    %19 = arith.addf %16, %18 : vector<8x128xf32>
    %20 = math.tanh %19 : vector<8x128xf32>
    %c1_6 = arith.constant 1 : index
    %21 = memref.load %arg4[%c1_6] : memref<14xf32, #tpu.memory_space<smem>>
    %22 = vector.broadcast %21 : f32 to vector<8x128xf32>
    %23 = arith.mulf %20, %22 : vector<8x128xf32>
    %24 = arith.addf %13, %23 : vector<8x128xf32>
    %c2 = arith.constant 2 : index
    %25 = memref.load %arg2[%c2] : memref<14xf32, #tpu.memory_space<smem>>
    %26 = vector.broadcast %25 : f32 to vector<8x128xf32>
    %27 = arith.mulf %0, %26 : vector<8x128xf32>
    %c2_7 = arith.constant 2 : index
    %28 = memref.load %arg3[%c2_7] : memref<14xf32, #tpu.memory_space<smem>>
    %29 = vector.broadcast %28 : f32 to vector<8x128xf32>
    %30 = arith.addf %27, %29 : vector<8x128xf32>
    %31 = math.tanh %30 : vector<8x128xf32>
    %c2_8 = arith.constant 2 : index
    %32 = memref.load %arg4[%c2_8] : memref<14xf32, #tpu.memory_space<smem>>
    %33 = vector.broadcast %32 : f32 to vector<8x128xf32>
    %34 = arith.mulf %31, %33 : vector<8x128xf32>
    %35 = arith.addf %24, %34 : vector<8x128xf32>
    %c3 = arith.constant 3 : index
    %36 = memref.load %arg2[%c3] : memref<14xf32, #tpu.memory_space<smem>>
    %37 = vector.broadcast %36 : f32 to vector<8x128xf32>
    %38 = arith.mulf %0, %37 : vector<8x128xf32>
    %c3_9 = arith.constant 3 : index
    %39 = memref.load %arg3[%c3_9] : memref<14xf32, #tpu.memory_space<smem>>
    %40 = vector.broadcast %39 : f32 to vector<8x128xf32>
    %41 = arith.addf %38, %40 : vector<8x128xf32>
    %42 = math.tanh %41 : vector<8x128xf32>
    %c3_10 = arith.constant 3 : index
    %43 = memref.load %arg4[%c3_10] : memref<14xf32, #tpu.memory_space<smem>>
    %44 = vector.broadcast %43 : f32 to vector<8x128xf32>
    %45 = arith.mulf %42, %44 : vector<8x128xf32>
    %46 = arith.addf %35, %45 : vector<8x128xf32>
    %c4 = arith.constant 4 : index
    %47 = memref.load %arg2[%c4] : memref<14xf32, #tpu.memory_space<smem>>
    %48 = vector.broadcast %47 : f32 to vector<8x128xf32>
    %49 = arith.mulf %0, %48 : vector<8x128xf32>
    %c4_11 = arith.constant 4 : index
    %50 = memref.load %arg3[%c4_11] : memref<14xf32, #tpu.memory_space<smem>>
    %51 = vector.broadcast %50 : f32 to vector<8x128xf32>
    %52 = arith.addf %49, %51 : vector<8x128xf32>
    %53 = math.tanh %52 : vector<8x128xf32>
    %c4_12 = arith.constant 4 : index
    %54 = memref.load %arg4[%c4_12] : memref<14xf32, #tpu.memory_space<smem>>
    %55 = vector.broadcast %54 : f32 to vector<8x128xf32>
    %56 = arith.mulf %53, %55 : vector<8x128xf32>
    %57 = arith.addf %46, %56 : vector<8x128xf32>
    %c5 = arith.constant 5 : index
    %58 = memref.load %arg2[%c5] : memref<14xf32, #tpu.memory_space<smem>>
    %59 = vector.broadcast %58 : f32 to vector<8x128xf32>
    %60 = arith.mulf %0, %59 : vector<8x128xf32>
    %c5_13 = arith.constant 5 : index
    %61 = memref.load %arg3[%c5_13] : memref<14xf32, #tpu.memory_space<smem>>
    %62 = vector.broadcast %61 : f32 to vector<8x128xf32>
    %63 = arith.addf %60, %62 : vector<8x128xf32>
    %64 = math.tanh %63 : vector<8x128xf32>
    %c5_14 = arith.constant 5 : index
    %65 = memref.load %arg4[%c5_14] : memref<14xf32, #tpu.memory_space<smem>>
    %66 = vector.broadcast %65 : f32 to vector<8x128xf32>
    %67 = arith.mulf %64, %66 : vector<8x128xf32>
    %68 = arith.addf %57, %67 : vector<8x128xf32>
    %c6 = arith.constant 6 : index
    %69 = memref.load %arg2[%c6] : memref<14xf32, #tpu.memory_space<smem>>
    %70 = vector.broadcast %69 : f32 to vector<8x128xf32>
    %71 = arith.mulf %0, %70 : vector<8x128xf32>
    %c6_15 = arith.constant 6 : index
    %72 = memref.load %arg3[%c6_15] : memref<14xf32, #tpu.memory_space<smem>>
    %73 = vector.broadcast %72 : f32 to vector<8x128xf32>
    %74 = arith.addf %71, %73 : vector<8x128xf32>
    %75 = math.tanh %74 : vector<8x128xf32>
    %c6_16 = arith.constant 6 : index
    %76 = memref.load %arg4[%c6_16] : memref<14xf32, #tpu.memory_space<smem>>
    %77 = vector.broadcast %76 : f32 to vector<8x128xf32>
    %78 = arith.mulf %75, %77 : vector<8x128xf32>
    %79 = arith.addf %68, %78 : vector<8x128xf32>
    %c7 = arith.constant 7 : index
    %80 = memref.load %arg2[%c7] : memref<14xf32, #tpu.memory_space<smem>>
    %81 = vector.broadcast %80 : f32 to vector<8x128xf32>
    %82 = arith.mulf %0, %81 : vector<8x128xf32>
    %c7_17 = arith.constant 7 : index
    %83 = memref.load %arg3[%c7_17] : memref<14xf32, #tpu.memory_space<smem>>
    %84 = vector.broadcast %83 : f32 to vector<8x128xf32>
    %85 = arith.addf %82, %84 : vector<8x128xf32>
    %86 = math.tanh %85 : vector<8x128xf32>
    %c7_18 = arith.constant 7 : index
    %87 = memref.load %arg4[%c7_18] : memref<14xf32, #tpu.memory_space<smem>>
    %88 = vector.broadcast %87 : f32 to vector<8x128xf32>
    %89 = arith.mulf %86, %88 : vector<8x128xf32>
    %90 = arith.addf %79, %89 : vector<8x128xf32>
    %c8 = arith.constant 8 : index
    %91 = memref.load %arg2[%c8] : memref<14xf32, #tpu.memory_space<smem>>
    %92 = vector.broadcast %91 : f32 to vector<8x128xf32>
    %93 = arith.mulf %0, %92 : vector<8x128xf32>
    %c8_19 = arith.constant 8 : index
    %94 = memref.load %arg3[%c8_19] : memref<14xf32, #tpu.memory_space<smem>>
    %95 = vector.broadcast %94 : f32 to vector<8x128xf32>
    %96 = arith.addf %93, %95 : vector<8x128xf32>
    %97 = math.tanh %96 : vector<8x128xf32>
    %c8_20 = arith.constant 8 : index
    %98 = memref.load %arg4[%c8_20] : memref<14xf32, #tpu.memory_space<smem>>
    %99 = vector.broadcast %98 : f32 to vector<8x128xf32>
    %100 = arith.mulf %97, %99 : vector<8x128xf32>
    %101 = arith.addf %90, %100 : vector<8x128xf32>
    %c9 = arith.constant 9 : index
    %102 = memref.load %arg2[%c9] : memref<14xf32, #tpu.memory_space<smem>>
    %103 = vector.broadcast %102 : f32 to vector<8x128xf32>
    %104 = arith.mulf %0, %103 : vector<8x128xf32>
    %c9_21 = arith.constant 9 : index
    %105 = memref.load %arg3[%c9_21] : memref<14xf32, #tpu.memory_space<smem>>
    %106 = vector.broadcast %105 : f32 to vector<8x128xf32>
    %107 = arith.addf %104, %106 : vector<8x128xf32>
    %108 = math.tanh %107 : vector<8x128xf32>
    %c9_22 = arith.constant 9 : index
    %109 = memref.load %arg4[%c9_22] : memref<14xf32, #tpu.memory_space<smem>>
    %110 = vector.broadcast %109 : f32 to vector<8x128xf32>
    %111 = arith.mulf %108, %110 : vector<8x128xf32>
    %112 = arith.addf %101, %111 : vector<8x128xf32>
    %c10 = arith.constant 10 : index
    %113 = memref.load %arg2[%c10] : memref<14xf32, #tpu.memory_space<smem>>
    %114 = vector.broadcast %113 : f32 to vector<8x128xf32>
    %115 = arith.mulf %0, %114 : vector<8x128xf32>
    %c10_23 = arith.constant 10 : index
    %116 = memref.load %arg3[%c10_23] : memref<14xf32, #tpu.memory_space<smem>>
    %117 = vector.broadcast %116 : f32 to vector<8x128xf32>
    %118 = arith.addf %115, %117 : vector<8x128xf32>
    %119 = math.tanh %118 : vector<8x128xf32>
    %c10_24 = arith.constant 10 : index
    %120 = memref.load %arg4[%c10_24] : memref<14xf32, #tpu.memory_space<smem>>
    %121 = vector.broadcast %120 : f32 to vector<8x128xf32>
    %122 = arith.mulf %119, %121 : vector<8x128xf32>
    %123 = arith.addf %112, %122 : vector<8x128xf32>
    %c11 = arith.constant 11 : index
    %124 = memref.load %arg2[%c11] : memref<14xf32, #tpu.memory_space<smem>>
    %125 = vector.broadcast %124 : f32 to vector<8x128xf32>
    %126 = arith.mulf %0, %125 : vector<8x128xf32>
    %c11_25 = arith.constant 11 : index
    %127 = memref.load %arg3[%c11_25] : memref<14xf32, #tpu.memory_space<smem>>
    %128 = vector.broadcast %127 : f32 to vector<8x128xf32>
    %129 = arith.addf %126, %128 : vector<8x128xf32>
    %130 = math.tanh %129 : vector<8x128xf32>
    %c11_26 = arith.constant 11 : index
    %131 = memref.load %arg4[%c11_26] : memref<14xf32, #tpu.memory_space<smem>>
    %132 = vector.broadcast %131 : f32 to vector<8x128xf32>
    %133 = arith.mulf %130, %132 : vector<8x128xf32>
    %134 = arith.addf %123, %133 : vector<8x128xf32>
    %c12 = arith.constant 12 : index
    %135 = memref.load %arg2[%c12] : memref<14xf32, #tpu.memory_space<smem>>
    %136 = vector.broadcast %135 : f32 to vector<8x128xf32>
    %137 = arith.mulf %0, %136 : vector<8x128xf32>
    %c12_27 = arith.constant 12 : index
    %138 = memref.load %arg3[%c12_27] : memref<14xf32, #tpu.memory_space<smem>>
    %139 = vector.broadcast %138 : f32 to vector<8x128xf32>
    %140 = arith.addf %137, %139 : vector<8x128xf32>
    %141 = math.tanh %140 : vector<8x128xf32>
    %c12_28 = arith.constant 12 : index
    %142 = memref.load %arg4[%c12_28] : memref<14xf32, #tpu.memory_space<smem>>
    %143 = vector.broadcast %142 : f32 to vector<8x128xf32>
    %144 = arith.mulf %141, %143 : vector<8x128xf32>
    %145 = arith.addf %134, %144 : vector<8x128xf32>
    %c13 = arith.constant 13 : index
    %146 = memref.load %arg2[%c13] : memref<14xf32, #tpu.memory_space<smem>>
    %147 = vector.broadcast %146 : f32 to vector<8x128xf32>
    %148 = arith.mulf %0, %147 : vector<8x128xf32>
    %c13_29 = arith.constant 13 : index
    %149 = memref.load %arg3[%c13_29] : memref<14xf32, #tpu.memory_space<smem>>
    %150 = vector.broadcast %149 : f32 to vector<8x128xf32>
    %151 = arith.addf %148, %150 : vector<8x128xf32>
    %152 = math.tanh %151 : vector<8x128xf32>
    %c13_30 = arith.constant 13 : index
    %153 = memref.load %arg4[%c13_30] : memref<14xf32, #tpu.memory_space<smem>>
    %154 = vector.broadcast %153 : f32 to vector<8x128xf32>
    %155 = arith.mulf %152, %154 : vector<8x128xf32>
    %156 = arith.addf %145, %155 : vector<8x128xf32>
    %c0_31 = arith.constant 0 : index
    %c0_32 = arith.constant 0 : index
    %157 = vector.load %arg6[%c0_31, %c0_32] : memref<8x128xf32, #tpu.memory_space<vmem>>, vector<8x128xf32>
    tpu.vector_store %arg6[%c0_31, %c0_32], %156 {strides = array<i32>} : memref<8x128xf32, #tpu.memory_space<vmem>>, vector<8x128xf32>,
    return
  }
  func.func @transform_0(%arg0: i32) -> (i32, i32) {
    %c0_i32 = arith.constant 0 : i32
    %c0_i32_0 = arith.constant 0 : i32
    return %arg0, %c0_i32 : i32, i32
  }
  func.func @transform_1(%arg0: i32) -> i32 {
    %c0_i32 = arith.constant 0 : i32
    %c0_i32_0 = arith.constant 0 : i32
    return %c0_i32 : i32
  }
  func.func @transform_2(%arg0: i32) -> i32 {
    %c0_i32 = arith.constant 0 : i32
    %c0_i32_0 = arith.constant 0 : i32
    return %c0_i32 : i32
  }
  func.func @transform_3(%arg0: i32) -> i32 {
    %c0_i32 = arith.constant 0 : i32
    %c0_i32_0 = arith.constant 0 : i32
    return %c0_i32 : i32
  }
  func.func @transform_4(%arg0: i32) -> i32 {
    %c0_i32 = arith.constant 0 : i32
    %c0_i32_0 = arith.constant 0 : i32
    return %c0_i32 : i32
  }
  func.func @transform_5(%arg0: i32) -> (i32, i32) {
    %c0_i32 = arith.constant 0 : i32
    %c0_i32_0 = arith.constant 0 : i32
    return %arg0, %c0_i32 : i32, i32
  }
}

</mosaic_0001>

<llo_original>
// kernel: tpu_custom_call.1
$region0: #{tpu_custom_call.1}
  #allocation0 [shape = 'u32[]', space=smem, size = 0x4, offset = 0x4, fixed_abs, tag = 'smem constant byte address 0x4 - core index']
  #allocation1 [shape = 'u32[144,128]{1,0:T(1,128)}', space=vmem, size = 0x12000, scoped, tag = 'internal scratch']
  #allocation2 [shape = 'f32[1]{0:T(128)S(6)}', space=smem, size = 0x200, scoped, tag = 'scoped memory for tpu_custom_call.1']
  %s0 = inlined_call_operand.hbm [shape: f32[8,128], index: 0, kind: input, shape index: {}]
  %s1 = inlined_call_operand.vmem [shape: f32[14], index: 1, kind: input, shape index: {}]
  %s2 = inlined_call_operand.vmem [shape: f32[14], index: 2, kind: input, shape index: {}]
  %s3 = inlined_call_operand.vmem [shape: f32[14], index: 3, kind: input, shape index: {}]
  %s4 = inlined_call_operand.<no memory space> [shape: f32[1], index: 4, kind: input, shape index: {}]
  %s5 = inlined_call_operand.hbm [shape: f32[8,128], index: 5, kind: output, shape index: {}]
  %s6 = sld [smem:[#allocation0]]
  $region46: #{tpu_custom_call.1} parent=0
    _
  %s8 = ssub.s32 1, %s6
  %s9 = scalar_select 0, %s8, %s6
  %10 = sst [smem:[#allocation2]] %s4
  $region1: #{tpu_custom_call.1} parent=0
    #allocation3 [shape = 'u8[4096]{0}', space=vmem, size = 0x1000, scoped, tag = 'input window, operand 0, single buffered']
    #allocation4 [shape = 's32[1]{0}', space=sflag, size = 0x4, scoped, tag = 'scoped memory for tpu_custom_call.1']
    #allocation5 [shape = 's32[1]{0}', space=sflag, size = 0x4, scoped, tag = 'scoped memory for tpu_custom_call.1']
    #allocation6 [shape = 's32[1]{0}', space=sflag, size = 0x4, scoped, tag = 'scoped memory for tpu_custom_call.1']
    #allocation7 [shape = 'u8[512]{0}', space=smem, size = 0x200, scoped, tag = 'input window, operand 1, single buffered']
    #allocation8 [shape = 'u8[512]{0}', space=smem, size = 0x200, scoped, tag = 'input window, operand 2, single buffered']
    #allocation9 [shape = 's32[1]{0}', space=sflag, size = 0x4, scoped, tag = 'scoped memory for tpu_custom_call.1']
    #allocation10 [shape = 'u8[512]{0}', space=smem, size = 0x200, scoped, tag = 'input window, operand 3, single buffered']
    #allocation11 [shape = 'u8[4096]{0}', space=vmem, size = 0x1000, scoped, tag = 'output window, operand 0, single buffered']
    %11 = vsyncpa [#allocation4], 0
    %12 = vsyncpa [#allocation6], 0
    %13 = vsyncpa [#allocation9], 0
    %14 = vsyncpa [#allocation5], 0
    // Predicated region
    $region2: #{tpu_custom_call.1} parent=1 // pred_check
      _
    $region3: #{tpu_custom_call.1} parent=1 // pred_check_branch
      %16 = sbr.rel (0) target = $region5
    $region4: #{tpu_custom_call.1} parent=1 // pred_region
      %s18 = ssub.s32 128, 128
      %19 = vsyncadd [#allocation4], %s18
      %s21 = sshll.u32 [#allocation3], 4
      %s22 = int_to_ptr.vmem [resolvable:$true] %s21
      %24 = dma.hbm_to_vmem [thread:$0]  %s0, 128, %s22, [#allocation4]
    $region5: #{tpu_custom_call.1} parent=1 // pred_fallthru
      _
    // Predicated region
    $region6: #{tpu_custom_call.1} parent=1 // pred_check
      _
    $region7: #{tpu_custom_call.1} parent=1 // pred_check_branch
      %26 = sbr.rel (0) target = $region9
    $region8: #{tpu_custom_call.1} parent=1 // pred_region
      %s28 = ssub.s32 16, 16
      %29 = vsyncadd [#allocation6], %s28
      %s31 = sshll.u32 %s1, 4
      %s32 = int_to_ptr.vmem [resolvable:$true] %s31
      %34 = dma.vmem_to_smem %s32, 16, [#allocation7], [#allocation6]
    $region9: #{tpu_custom_call.1} parent=1 // pred_fallthru
      _
    // Predicated region
    $region10: #{tpu_custom_call.1} parent=1 // pred_check
      _
    $region11: #{tpu_custom_call.1} parent=1 // pred_check_branch
      %36 = sbr.rel (0) target = $region13
    $region12: #{tpu_custom_call.1} parent=1 // pred_region
      %s38 = ssub.s32 16, 16
      %39 = vsyncadd [#allocation9], %s38
      %s41 = sshll.u32 %s2, 4
      %s42 = int_to_ptr.vmem [resolvable:$true] %s41
      %44 = dma.vmem_to_smem %s42, 16, [#allocation8], [#allocation9]
    $region13: #{tpu_custom_call.1} parent=1 // pred_fallthru
      _
    // Predicated region
    $region14: #{tpu_custom_call.1} parent=1 // pred_check
      _
    $region15: #{tpu_custom_call.1} parent=1 // pred_check_branch
      %46 = sbr.rel (0) target = $region17
    $region16: #{tpu_custom_call.1} parent=1 // pred_region
      %s48 = ssub.s32 16, 16
      %49 = vsyncadd [#allocation9], %s48
      %s51 = sshll.u32 %s3, 4
      %s52 = int_to_ptr.vmem [resolvable:$true] %s51
      %54 = dma.vmem_to_smem %s52, 16, [#allocation10], [#allocation9]
    $region17: #{tpu_custom_call.1} parent=1 // pred_fallthru
      _
    // Predicated region
    $region18: #{tpu_custom_call.1} parent=1 // pred_check
      _
    $region19: #{tpu_custom_call.1} parent=1 // pred_check_branch
      %56 = sbr.rel (0) target = $region21
    $region20: #{tpu_custom_call.1} parent=1 // pred_region
      _
    $region21: #{tpu_custom_call.1} parent=1 // pred_fallthru
      _
    // Predicated region
    $region22: #{tpu_custom_call.1} parent=1 // pred_check
      _
    $region23: #{tpu_custom_call.1} parent=1 // pred_check_branch
      %58 = sbr.rel (0) target = $region25
    $region24: #{tpu_custom_call.1} parent=1 // pred_region
      %59 = dma.done [#allocation4], 128
    $region25: #{tpu_custom_call.1} parent=1 // pred_fallthru
      _
    // Predicated region
    $region26: #{tpu_custom_call.1} parent=1 // pred_check
      _
    $region27: #{tpu_custom_call.1} parent=1 // pred_check_branch
      %61 = sbr.rel (0) target = $region29
    $region28: #{tpu_custom_call.1} parent=1 // pred_region
      %62 = dma.done [#allocation6], 16
    $region29: #{tpu_custom_call.1} parent=1 // pred_fallthru
      _
    // Predicated region
    $region30: #{tpu_custom_call.1} parent=1 // pred_check
      _
    $region31: #{tpu_custom_call.1} parent=1 // pred_check_branch
      %64 = sbr.rel (0) target = $region33
    $region32: #{tpu_custom_call.1} parent=1 // pred_region
      %65 = dma.done [#allocation9], 16
    $region33: #{tpu_custom_call.1} parent=1 // pred_fallthru
      _
    // Predicated region
    $region34: #{tpu_custom_call.1} parent=1 // pred_check
      _
    $region35: #{tpu_custom_call.1} parent=1 // pred_check_branch
      %67 = sbr.rel (0) target = $region37
    $region36: #{tpu_custom_call.1} parent=1 // pred_region
      %68 = dma.done [#allocation9], 16
    $region37: #{tpu_custom_call.1} parent=1 // pred_fallthru
      _
    %69 = sfence
    %v70 = vld [vmem:[#allocation3] sm:$0xff]
    %s71 = sld [smem:[#allocation2]]
    %v72 = vstv %s71
    %s73 = sld [smem:[#allocation7]]
    %v74 = vstv %s73
    %v75 = vmul.f32 %v70, %v74
    %s76 = sld [smem:[#allocation8]]
    %v77 = vstv %s76
    %v78 = vadd.f32 %v75, %v77
    %v79 = vtanh.pop %v78
    %s80 = sld [smem:[#allocation10]]
    %v81 = vstv %s80
    %v82 = vmul.f32 %v79, %v81
    %v83 = vadd.f32 %v72, %v82
    %s84 = sld [smem:[#allocation7 + $0x1]]
    %v85 = vstv %s84
    %v86 = vmul.f32 %v70, %v85
    %s87 = sld [smem:[#allocation8 + $0x1]]
    %v88 = vstv %s87
    %v89 = vadd.f32 %v86, %v88
    %v90 = vtanh.pop %v89
    %s91 = sld [smem:[#allocation10 + $0x1]]
    %v92 = vstv %s91
    %v93 = vmul.f32 %v90, %v92
    %v94 = vadd.f32 %v83, %v93
    %s95 = sld [smem:[#allocation7 + $0x2]]
    %v96 = vstv %s95
    %v97 = vmul.f32 %v70, %v96
    %s98 = sld [smem:[#allocation8 + $0x2]]
    %v99 = vstv %s98
    %v100 = vadd.f32 %v97, %v99
    %v101 = vtanh.pop %v100
    %s102 = sld [smem:[#allocation10 + $0x2]]
    %v103 = vstv %s102
    %v104 = vmul.f32 %v101, %v103
    %v105 = vadd.f32 %v94, %v104
    %s106 = sld [smem:[#allocation7 + $0x3]]
    %v107 = vstv %s106
    %v108 = vmul.f32 %v70, %v107
    %s109 = sld [smem:[#allocation8 + $0x3]]
    %v110 = vstv %s109
    %v111 = vadd.f32 %v108, %v110
    %v112 = vtanh.pop %v111
    %s113 = sld [smem:[#allocation10 + $0x3]]
    %v114 = vstv %s113
    %v115 = vmul.f32 %v112, %v114
    %v116 = vadd.f32 %v105, %v115
    %s117 = sld [smem:[#allocation7 + $0x4]]
    %v118 = vstv %s117
    %v119 = vmul.f32 %v70, %v118
    %s120 = sld [smem:[#allocation8 + $0x4]]
    %v121 = vstv %s120
    %v122 = vadd.f32 %v119, %v121
    %v123 = vtanh.pop %v122
    %s124 = sld [smem:[#allocation10 + $0x4]]
    %v125 = vstv %s124
    %v126 = vmul.f32 %v123, %v125
    %v127 = vadd.f32 %v116, %v126
    %s128 = sld [smem:[#allocation7 + $0x5]]
    %v129 = vstv %s128
    %v130 = vmul.f32 %v70, %v129
    %s131 = sld [smem:[#allocation8 + $0x5]]
    %v132 = vstv %s131
    %v133 = vadd.f32 %v130, %v132
    %v134 = vtanh.pop %v133
    %s135 = sld [smem:[#allocation10 + $0x5]]
    %v136 = vstv %s135
    %v137 = vmul.f32 %v134, %v136
    %v138 = vadd.f32 %v127, %v137
    %s139 = sld [smem:[#allocation7 + $0x6]]
    %v140 = vstv %s139
    %v141 = vmul.f32 %v70, %v140
    %s142 = sld [smem:[#allocation8 + $0x6]]
    %v143 = vstv %s142
    %v144 = vadd.f32 %v141, %v143
    %v145 = vtanh.pop %v144
    %s146 = sld [smem:[#allocation10 + $0x6]]
    %v147 = vstv %s146
    %v148 = vmul.f32 %v145, %v147
    %v149 = vadd.f32 %v138, %v148
    %s150 = sld [smem:[#allocation7 + $0x7]]
    %v151 = vstv %s150
    %v152 = vmul.f32 %v70, %v151
    %s153 = sld [smem:[#allocation8 + $0x7]]
    %v154 = vstv %s153
    %v155 = vadd.f32 %v152, %v154
    %v156 = vtanh.pop %v155
    %s157 = sld [smem:[#allocation10 + $0x7]]
    %v158 = vstv %s157
    %v159 = vmul.f32 %v156, %v158
    %v160 = vadd.f32 %v149, %v159
    %s161 = sld [smem:[#allocation7 + $0x8]]
    %v162 = vstv %s161
    %v163 = vmul.f32 %v70, %v162
    %s164 = sld [smem:[#allocation8 + $0x8]]
    %v165 = vstv %s164
    %v166 = vadd.f32 %v163, %v165
    %v167 = vtanh.pop %v166
    %s168 = sld [smem:[#allocation10 + $0x8]]
    %v169 = vstv %s168
    %v170 = vmul.f32 %v167, %v169
    %v171 = vadd.f32 %v160, %v170
    %s172 = sld [smem:[#allocation7 + $0x9]]
    %v173 = vstv %s172
    %v174 = vmul.f32 %v70, %v173
    %s175 = sld [smem:[#allocation8 + $0x9]]
    %v176 = vstv %s175
    %v177 = vadd.f32 %v174, %v176
    %v178 = vtanh.pop %v177
    %s179 = sld [smem:[#allocation10 + $0x9]]
    %v180 = vstv %s179
    %v181 = vmul.f32 %v178, %v180
    %v182 = vadd.f32 %v171, %v181
    %s183 = sld [smem:[#allocation7 + $0xa]]
    %v184 = vstv %s183
    %v185 = vmul.f32 %v70, %v184
    %s186 = sld [smem:[#allocation8 + $0xa]]
    %v187 = vstv %s186
    %v188 = vadd.f32 %v185, %v187
    %v189 = vtanh.pop %v188
    %s190 = sld [smem:[#allocation10 + $0xa]]
    %v191 = vstv %s190
    %v192 = vmul.f32 %v189, %v191
    %v193 = vadd.f32 %v182, %v192
    %s194 = sld [smem:[#allocation7 + $0xb]]
    %v195 = vstv %s194
    %v196 = vmul.f32 %v70, %v195
    %s197 = sld [smem:[#allocation8 + $0xb]]
    %v198 = vstv %s197
    %v199 = vadd.f32 %v196, %v198
    %v200 = vtanh.pop %v199
    %s201 = sld [smem:[#allocation10 + $0xb]]
    %v202 = vstv %s201
    %v203 = vmul.f32 %v200, %v202
    %v204 = vadd.f32 %v193, %v203
    %s205 = sld [smem:[#allocation7 + $0xc]]
    %v206 = vstv %s205
    %v207 = vmul.f32 %v70, %v206
    %s208 = sld [smem:[#allocation8 + $0xc]]
    %v209 = vstv %s208
    %v210 = vadd.f32 %v207, %v209
    %v211 = vtanh.pop %v210
    %s212 = sld [smem:[#allocation10 + $0xc]]
    %v213 = vstv %s212
    %v214 = vmul.f32 %v211, %v213
    %v215 = vadd.f32 %v204, %v214
    %s216 = sld [smem:[#allocation7 + $0xd]]
    %v217 = vstv %s216
    %v218 = vmul.f32 %v70, %v217
    %s219 = sld [smem:[#allocation8 + $0xd]]
    %v220 = vstv %s219
    %v221 = vadd.f32 %v218, %v220
    %v222 = vtanh.pop %v221
    %s223 = sld [smem:[#allocation10 + $0xd]]
    %v224 = vstv %s223
    %v225 = vmul.f32 %v222, %v224
    %v226 = vadd.f32 %v215, %v225
    %227 = vst [vmem:[#allocation11] sm:$0xff] %v226
    // Predicated region
    $region38: #{tpu_custom_call.1} parent=1 // pred_check
      _
    $region39: #{tpu_custom_call.1} parent=1 // pred_check_branch
      %229 = sbr.rel (0) target = $region41
    $region40: #{tpu_custom_call.1} parent=1 // pred_region
      %s231 = ssub.s32 128, 128
      %232 = vsyncadd [#allocation5], %s231
      %s234 = sshll.u32 [#allocation11], 4
      %s235 = int_to_ptr.vmem [resolvable:$true] %s234
      %237 = dma.vmem_to_hbm [thread:$0]  %s235, 128, %s5, [#allocation5]
    $region41: #{tpu_custom_call.1} parent=1 // pred_fallthru
      _
    // Predicated region
    $region42: #{tpu_custom_call.1} parent=1 // pred_check
      _
    $region43: #{tpu_custom_call.1} parent=1 // pred_check_branch
      %239 = sbr.rel (0) target = $region45
    $region44: #{tpu_custom_call.1} parent=1 // pred_region
      %240 = dma.done [#allocation5], 128
    $region45: #{tpu_custom_call.1} parent=1 // pred_fallthru
      _
    %241 = vsyncpa [#allocation4], 1
    %242 = vsyncpa [#allocation5], 1
    %243 = vsyncpa [#allocation6], 1
    %244 = vsyncpa [#allocation9], 1

</llo_original>
